<compile_context>
chip_gen: v5e
topology: v5e:2x2
jax: 0.10.0
libtpu: 0.0.40
codegen_flags: <defaults>
</compile_context>

<pallas_src>
import functools
import math

import jax
import jax.numpy as jnp
from jax.experimental import pallas as pl
from jax.experimental.pallas import tpu as pltpu


def _num_tensorcores():
    """Best-effort TensorCore count per chip (2 on v7x, else 1)."""
    try:
        kind = str(getattr(jax.devices()[0], "device_kind", "")).lower()
    except Exception:
        return 1
    return 2 if "v7" in kind else 1


def _pick_batch_tile(n, in_bytes_per_batch, out_bytes_per_batch,
                     vmem_budget=12 << 20, max_unroll=8):
    """Largest batch tile (divisor of n) that fits a VMEM budget, keeps the
    in-kernel unroll bounded, and leaves enough grid steps to feed every
    TensorCore (>=2 steps/core on multi-core chips, 1 big step otherwise)."""
    n_tc = _num_tensorcores()
    target_steps = 2 * n_tc if n_tc > 1 else 1

    def fits(bt):
        # double-buffered input + output blocks per step
        return 2 * bt * (in_bytes_per_batch + out_bytes_per_batch) <= vmem_budget

    divisors = [d for d in range(1, n + 1) if n % d == 0]
    fitting = [d for d in divisors if d <= max_unroll and fits(d)] or [1]
    enough_steps = [d for d in fitting if n // d >= target_steps]
    bt = max(enough_steps) if enough_steps else min(fitting)
    return bt, n // bt


def _gf_conv_kernel(w_ref, x_ref, o_ref, *, kh, kw, wp, m_full):
    """One batch tile per grid step.

    w_ref: (KH*KW, out_ch, C_in)   bf16, constant block index => stays resident
    x_ref: (bt, C_in, HP*WP+KW-1)  bf16 flattened padded frames (read 1x from HBM)
    o_ref: (bt, out_ch, HO1*WP)    dense stride-1 output rows in WP-wide frames
    """
    bt = x_ref.shape[0]
    out_ch = w_ref.shape[1]
    for b in range(bt):                          # static unroll, bt is small
        x_b = x_ref[b, :, :]                     # (C_in, L) VMEM-resident frame
        acc = jnp.zeros((out_ch, m_full), jnp.float32)
        for t in range(kh * kw):                 # taps = static shifted slices
            off = (t // kw) * wp + (t % kw)
            x_t = x_b[:, off:off + m_full]       # (C_in, m_full)
            acc = acc + jnp.dot(w_ref[t, :, :], x_t,
                                preferred_element_type=jnp.float32)
        o_ref[b, :, :] = acc.astype(o_ref.dtype)


def gf_layer_forward(x, filters, weights, *, stride=1, padding=1,
                     compute_dtype=jnp.bfloat16):
    """GFLayer.forward for groups=1.

    x:       (N, C_in, H, W)       NCHW
    filters: (F, KH, KW)           fixed filter bank
    weights: (out_ch, C_in, F)     learned mixing weights
    returns  (N, out_ch, HO, WO)
    """
    n, c_in, h, w = x.shape
    _, kh, kw = filters.shape
    out_ch = weights.shape[0]
    # TODO(synk): groups > 1 not implemented (module default groups=1).

    # Effective conv kernel: (filters[None,None]*weights[...,None,None]).sum(2)
    w_eff = jnp.einsum("fhw,ocf->ochw", filters, weights)       # (O, C, KH, KW)
    # Tap-major layout for the in-kernel per-tap dots: (KH*KW, O, C).
    w_taps = jnp.transpose(w_eff, (2, 3, 0, 1)).reshape(kh * kw, out_ch, c_in)
    w_taps = w_taps.astype(compute_dtype)

    # Cast FIRST, then pad (halves wrapper HBM traffic vs. casting later).
    xp = jnp.pad(x.astype(compute_dtype),
                 ((0, 0), (0, 0), (padding, padding), (padding, padding)))
    hp, wp = h + 2 * padding, w + 2 * padding
    # Dense (stride-1) sliding-window geometry over the padded frame.
    ho1, wo1 = hp - kh + 1, wp - kw + 1
    m_full = ho1 * wp                    # kernel free dim (incl. KW-1 junk cols/row)
    l_flat = hp * wp + (kw - 1)          # room for the largest tap offset

    # Contiguous flatten (free) + KW-1 zero tail; NO 9x im2col materialization.
    x_flat = jnp.pad(xp.reshape(n, c_in, hp * wp),
                     ((0, 0), (0, 0), (0, kw - 1)))

    out_dtype = x.dtype
    bt, steps = _pick_batch_tile(
        n,
        in_bytes_per_batch=c_in * l_flat * jnp.dtype(compute_dtype).itemsize,
        out_bytes_per_batch=out_ch * m_full * jnp.dtype(out_dtype).itemsize)

    out_flat = pl.pallas_call(
        functools.partial(_gf_conv_kernel, kh=kh, kw=kw, wp=wp, m_full=m_full),
        out_shape=jax.ShapeDtypeStruct((n, out_ch, m_full), out_dtype),
        grid=(steps,),
        in_specs=[
            # ~O(KB) folded weights; constant block index => not re-DMA'd per step
            pl.BlockSpec((kh * kw, out_ch, c_in), lambda s: (0, 0, 0)),
            # one flattened padded frame per batch element of the tile
            pl.BlockSpec((bt, c_in, l_flat), lambda s: (s, 0, 0)),
        ],
        out_specs=pl.BlockSpec((bt, out_ch, m_full), lambda s: (s, 0, 0)),
        compiler_params=pltpu.CompilerParams(
            dimension_semantics=("parallel",)),
    )(w_taps, x_flat)

    # Free reshape + crop the KW-1 wrap-around columns of each WP-wide row.
    out = out_flat.reshape(n, out_ch, ho1, wp)[:, :, :, :wo1]
    if stride != 1:
        # TODO(synk): stride>1 reuses the dense stride-1 compute and subsamples
        # (correct, but over-computes by ~stride^2).
        out = out[:, :, ::stride, ::stride]
    return out


if __name__ == "__main__":
    # Small shapes consistent with the module: groups=1, 3x3 filter bank.
    N, C_IN, H, W = 2, 4, 16, 16
    OUT_CH = 8
    NUM_F, KH, KW = 3, 3, 3
    STRIDE, PADDING = 1, 1

    key = jax.random.PRNGKey(0)
    k_x, k_f, k_w = jax.random.split(key, 3)

    x = jax.random.normal(k_x, (N, C_IN, H, W), dtype=jnp.float32)
    # Fixed filter bank (deterministic, stands in for the module's `filters`).
    filters = jax.random.normal(k_f, (NUM_F, KH, KW), dtype=jnp.float32)
    # reset_parameters(): uniform(-stdv, stdv), stdv = 1/sqrt(in_ch*KH*KW)
    n_fan = C_IN * KH * KW
    stdv = 1.0 / math.sqrt(n_fan)
    weights = jax.random.uniform(
        k_w, (OUT_CH, C_IN, NUM_F), dtype=jnp.float32,
        minval=-stdv, maxval=stdv)
    # The module also allocates a `bias` parameter that forward() never applies
    # — reproduced faithfully by omitting it.

    fwd = jax.jit(lambda a, f, wgt: gf_layer_forward(
        a, f, wgt, stride=STRIDE, padding=PADDING))
    out = jax.block_until_ready(fwd(x, filters, weights))

    # Plain-JAX reference (same math path as F.conv2d). Inputs rounded to bf16
    # to match the kernel's MXU compute dtype; both accumulate in f32.
    w_eff = jnp.einsum("fhw,ocf->ochw", filters, weights)
    x_bf = x.astype(jnp.bfloat16).astype(jnp.float32)
    w_bf = w_eff.astype(jnp.bfloat16).astype(jnp.float32)
    ref = jax.lax.conv_general_dilated(
        x_bf, w_bf, window_strides=(STRIDE, STRIDE),
        padding=[(PADDING, PADDING), (PADDING, PADDING)],
        dimension_numbers=("NCHW", "OIHW", "NCHW"))
    assert out.shape == ref.shape, (out.shape, ref.shape)
    max_err = float(jnp.max(jnp.abs(out - ref)))
    assert jnp.allclose(out, ref, atol=2e-2, rtol=2e-2), max_err

    print("KERNEL_OK")
</pallas_src>

<mosaic_0001>
module attributes {stable_mosaic.version = 11 : i64} {
  func.func @_gf_conv_kernel(%arg0: i32, %arg1: memref<9x8x4xbf16, #tpu.memory_space<vmem>>, %arg2: memref<2x4x326xbf16, #tpu.memory_space<vmem>>, %arg3: memref<2x8x288xf32, #tpu.memory_space<vmem>>) attributes {dimension_semantics = [#tpu.dimension_semantics<parallel>], iteration_bounds = array<i64: 1>, scalar_prefetch = 0 : i64, scratch_operands = 0 : i64, tpu.core_type = #tpu.core_type<tc>, window_params = [{pipeline_mode = #tpu.pipeline_mode<synchronous>, transform_indices = @transform_0, window_bounds = array<i64: 9, 8, 4>}, {transform_indices = @transform_1, window_bounds = array<i64: 2, 4, 326>}, {transform_indices = @transform_2, window_bounds = array<i64: 2, 8, 288>}]} {
    %c0 = arith.constant 0 : index
    %c0_0 = arith.constant 0 : index
    %c0_1 = arith.constant 0 : index
    %0 = vector.load %arg2[%c0, %c0_0, %c0_1] : memref<2x4x326xbf16, #tpu.memory_space<vmem>>, vector<1x4x326xbf16>
    %1 = vector.shape_cast %0 : vector<1x4x326xbf16> to vector<4x326xbf16>
    %cst = arith.constant 0.000000e+00 : f32
    %2 = vector.broadcast %cst : f32 to vector<8x288xf32>
    %3 = vector.extract_strided_slice %1 {offsets = [0, 0], sizes = [4, 288], strides = [1, 1]} : vector<4x326xbf16> to vector<4x288xbf16>
    %c0_2 = arith.constant 0 : index
    %c0_3 = arith.constant 0 : index
    %c0_4 = arith.constant 0 : index
    %4 = vector.load %arg1[%c0_2, %c0_3, %c0_4] : memref<9x8x4xbf16, #tpu.memory_space<vmem>>, vector<1x8x4xbf16>
    %5 = vector.shape_cast %4 : vector<1x8x4xbf16> to vector<8x4xbf16>
    %cst_5 = arith.constant dense<0.000000e+00> : vector<8x288xf32>
    %6 = tpu.matmul %5, %3, %cst_5 {dimension_numbers = #tpu.dot_dimension_numbers<[1], [0], [0], [1], [0, 0, 1, 1], [], []>} : vector<8x4xbf16>, vector<4x288xbf16>, vector<8x288xf32> -> vector<8x288xf32>
    %7 = arith.addf %2, %6 : vector<8x288xf32>
    %8 = vector.extract_strided_slice %1 {offsets = [0, 1], sizes = [4, 288], strides = [1, 1]} : vector<4x326xbf16> to vector<4x288xbf16>
    %c1 = arith.constant 1 : index
    %c0_6 = arith.constant 0 : index
    %c0_7 = arith.constant 0 : index
    %9 = vector.load %arg1[%c1, %c0_6, %c0_7] : memref<9x8x4xbf16, #tpu.memory_space<vmem>>, vector<1x8x4xbf16>
    %10 = vector.shape_cast %9 : vector<1x8x4xbf16> to vector<8x4xbf16>
    %cst_8 = arith.constant dense<0.000000e+00> : vector<8x288xf32>
    %11 = tpu.matmul %10, %8, %cst_8 {dimension_numbers = #tpu.dot_dimension_numbers<[1], [0], [0], [1], [0, 0, 1, 1], [], []>} : vector<8x4xbf16>, vector<4x288xbf16>, vector<8x288xf32> -> vector<8x288xf32>
    %12 = arith.addf %7, %11 : vector<8x288xf32>
    %13 = vector.extract_strided_slice %1 {offsets = [0, 2], sizes = [4, 288], strides = [1, 1]} : vector<4x326xbf16> to vector<4x288xbf16>
    %c2 = arith.constant 2 : index
    %c0_9 = arith.constant 0 : index
    %c0_10 = arith.constant 0 : index
    %14 = vector.load %arg1[%c2, %c0_9, %c0_10] : memref<9x8x4xbf16, #tpu.memory_space<vmem>>, vector<1x8x4xbf16>
    %15 = vector.shape_cast %14 : vector<1x8x4xbf16> to vector<8x4xbf16>
    %cst_11 = arith.constant dense<0.000000e+00> : vector<8x288xf32>
    %16 = tpu.matmul %15, %13, %cst_11 {dimension_numbers = #tpu.dot_dimension_numbers<[1], [0], [0], [1], [0, 0, 1, 1], [], []>} : vector<8x4xbf16>, vector<4x288xbf16>, vector<8x288xf32> -> vector<8x288xf32>
    %17 = arith.addf %12, %16 : vector<8x288xf32>
    %18 = vector.extract_strided_slice %1 {offsets = [0, 18], sizes = [4, 288], strides = [1, 1]} : vector<4x326xbf16> to vector<4x288xbf16>
    %c3 = arith.constant 3 : index
    %c0_12 = arith.constant 0 : index
    %c0_13 = arith.constant 0 : index
    %19 = vector.load %arg1[%c3, %c0_12, %c0_13] : memref<9x8x4xbf16, #tpu.memory_space<vmem>>, vector<1x8x4xbf16>
    %20 = vector.shape_cast %19 : vector<1x8x4xbf16> to vector<8x4xbf16>
    %cst_14 = arith.constant dense<0.000000e+00> : vector<8x288xf32>
    %21 = tpu.matmul %20, %18, %cst_14 {dimension_numbers = #tpu.dot_dimension_numbers<[1], [0], [0], [1], [0, 0, 1, 1], [], []>} : vector<8x4xbf16>, vector<4x288xbf16>, vector<8x288xf32> -> vector<8x288xf32>
    %22 = arith.addf %17, %21 : vector<8x288xf32>
    %23 = vector.extract_strided_slice %1 {offsets = [0, 19], sizes = [4, 288], strides = [1, 1]} : vector<4x326xbf16> to vector<4x288xbf16>
    %c4 = arith.constant 4 : index
    %c0_15 = arith.constant 0 : index
    %c0_16 = arith.constant 0 : index
    %24 = vector.load %arg1[%c4, %c0_15, %c0_16] : memref<9x8x4xbf16, #tpu.memory_space<vmem>>, vector<1x8x4xbf16>
    %25 = vector.shape_cast %24 : vector<1x8x4xbf16> to vector<8x4xbf16>
    %cst_17 = arith.constant dense<0.000000e+00> : vector<8x288xf32>
    %26 = tpu.matmul %25, %23, %cst_17 {dimension_numbers = #tpu.dot_dimension_numbers<[1], [0], [0], [1], [0, 0, 1, 1], [], []>} : vector<8x4xbf16>, vector<4x288xbf16>, vector<8x288xf32> -> vector<8x288xf32>
    %27 = arith.addf %22, %26 : vector<8x288xf32>
    %28 = vector.extract_strided_slice %1 {offsets = [0, 20], sizes = [4, 288], strides = [1, 1]} : vector<4x326xbf16> to vector<4x288xbf16>
    %c5 = arith.constant 5 : index
    %c0_18 = arith.constant 0 : index
    %c0_19 = arith.constant 0 : index
    %29 = vector.load %arg1[%c5, %c0_18, %c0_19] : memref<9x8x4xbf16, #tpu.memory_space<vmem>>, vector<1x8x4xbf16>
    %30 = vector.shape_cast %29 : vector<1x8x4xbf16> to vector<8x4xbf16>
    %cst_20 = arith.constant dense<0.000000e+00> : vector<8x288xf32>
    %31 = tpu.matmul %30, %28, %cst_20 {dimension_numbers = #tpu.dot_dimension_numbers<[1], [0], [0], [1], [0, 0, 1, 1], [], []>} : vector<8x4xbf16>, vector<4x288xbf16>, vector<8x288xf32> -> vector<8x288xf32>
    %32 = arith.addf %27, %31 : vector<8x288xf32>
    %33 = vector.extract_strided_slice %1 {offsets = [0, 36], sizes = [4, 288], strides = [1, 1]} : vector<4x326xbf16> to vector<4x288xbf16>
    %c6 = arith.constant 6 : index
    %c0_21 = arith.constant 0 : index
    %c0_22 = arith.constant 0 : index
    %34 = vector.load %arg1[%c6, %c0_21, %c0_22] : memref<9x8x4xbf16, #tpu.memory_space<vmem>>, vector<1x8x4xbf16>
    %35 = vector.shape_cast %34 : vector<1x8x4xbf16> to vector<8x4xbf16>
    %cst_23 = arith.constant dense<0.000000e+00> : vector<8x288xf32>
    %36 = tpu.matmul %35, %33, %cst_23 {dimension_numbers = #tpu.dot_dimension_numbers<[1], [0], [0], [1], [0, 0, 1, 1], [], []>} : vector<8x4xbf16>, vector<4x288xbf16>, vector<8x288xf32> -> vector<8x288xf32>
    %37 = arith.addf %32, %36 : vector<8x288xf32>
    %38 = vector.extract_strided_slice %1 {offsets = [0, 37], sizes = [4, 288], strides = [1, 1]} : vector<4x326xbf16> to vector<4x288xbf16>
    %c7 = arith.constant 7 : index
    %c0_24 = arith.constant 0 : index
    %c0_25 = arith.constant 0 : index
    %39 = vector.load %arg1[%c7, %c0_24, %c0_25] : memref<9x8x4xbf16, #tpu.memory_space<vmem>>, vector<1x8x4xbf16>
    %40 = vector.shape_cast %39 : vector<1x8x4xbf16> to vector<8x4xbf16>
    %cst_26 = arith.constant dense<0.000000e+00> : vector<8x288xf32>
    %41 = tpu.matmul %40, %38, %cst_26 {dimension_numbers = #tpu.dot_dimension_numbers<[1], [0], [0], [1], [0, 0, 1, 1], [], []>} : vector<8x4xbf16>, vector<4x288xbf16>, vector<8x288xf32> -> vector<8x288xf32>
    %42 = arith.addf %37, %41 : vector<8x288xf32>
    %43 = vector.extract_strided_slice %1 {offsets = [0, 38], sizes = [4, 288], strides = [1, 1]} : vector<4x326xbf16> to vector<4x288xbf16>
    %c8 = arith.constant 8 : index
    %c0_27 = arith.constant 0 : index
    %c0_28 = arith.constant 0 : index
    %44 = vector.load %arg1[%c8, %c0_27, %c0_28] : memref<9x8x4xbf16, #tpu.memory_space<vmem>>, vector<1x8x4xbf16>
    %45 = vector.shape_cast %44 : vector<1x8x4xbf16> to vector<8x4xbf16>
    %cst_29 = arith.constant dense<0.000000e+00> : vector<8x288xf32>
    %46 = tpu.matmul %45, %43, %cst_29 {dimension_numbers = #tpu.dot_dimension_numbers<[1], [0], [0], [1], [0, 0, 1, 1], [], []>} : vector<8x4xbf16>, vector<4x288xbf16>, vector<8x288xf32> -> vector<8x288xf32>
    %47 = arith.addf %42, %46 : vector<8x288xf32>
    %c0_30 = arith.constant 0 : index
    %c0_31 = arith.constant 0 : index
    %c0_32 = arith.constant 0 : index
    %48 = vector.load %arg3[%c0_30, %c0_31, %c0_32] : memref<2x8x288xf32, #tpu.memory_space<vmem>>, vector<1x8x288xf32>
    %49 = vector.shape_cast %48 : vector<1x8x288xf32> to vector<8x288xf32>
    %50 = vector.shape_cast %47 : vector<8x288xf32> to vector<1x8x288xf32>
    tpu.vector_store %arg3[%c0_30, %c0_31, %c0_32], %50 {strides = array<i32>} : memref<2x8x288xf32, #tpu.memory_space<vmem>>, vector<1x8x288xf32>,
    %c1_33 = arith.constant 1 : index
    %c0_34 = arith.constant 0 : index
    %c0_35 = arith.constant 0 : index
    %51 = vector.load %arg2[%c1_33, %c0_34, %c0_35] : memref<2x4x326xbf16, #tpu.memory_space<vmem>>, vector<1x4x326xbf16>
    %52 = vector.shape_cast %51 : vector<1x4x326xbf16> to vector<4x326xbf16>
    %cst_36 = arith.constant 0.000000e+00 : f32
    %53 = vector.broadcast %cst_36 : f32 to vector<8x288xf32>
    %54 = vector.extract_strided_slice %52 {offsets = [0, 0], sizes = [4, 288], strides = [1, 1]} : vector<4x326xbf16> to vector<4x288xbf16>
    %c0_37 = arith.constant 0 : index
    %c0_38 = arith.constant 0 : index
    %c0_39 = arith.constant 0 : index
    %55 = vector.load %arg1[%c0_37, %c0_38, %c0_39] : memref<9x8x4xbf16, #tpu.memory_space<vmem>>, vector<1x8x4xbf16>
    %56 = vector.shape_cast %55 : vector<1x8x4xbf16> to vector<8x4xbf16>
    %cst_40 = arith.constant dense<0.000000e+00> : vector<8x288xf32>
    %57 = tpu.matmul %56, %54, %cst_40 {dimension_numbers = #tpu.dot_dimension_numbers<[1], [0], [0], [1], [0, 0, 1, 1], [], []>} : vector<8x4xbf16>, vector<4x288xbf16>, vector<8x288xf32> -> vector<8x288xf32>
    %58 = arith.addf %53, %57 : vector<8x288xf32>
    %59 = vector.extract_strided_slice %52 {offsets = [0, 1], sizes = [4, 288], strides = [1, 1]} : vector<4x326xbf16> to vector<4x288xbf16>
    %c1_41 = arith.constant 1 : index
    %c0_42 = arith.constant 0 : index
    %c0_43 = arith.constant 0 : index
    %60 = vector.load %arg1[%c1_41, %c0_42, %c0_43] : memref<9x8x4xbf16, #tpu.memory_space<vmem>>, vector<1x8x4xbf16>
    %61 = vector.shape_cast %60 : vector<1x8x4xbf16> to vector<8x4xbf16>
    %cst_44 = arith.constant dense<0.000000e+00> : vector<8x288xf32>
    %62 = tpu.matmul %61, %59, %cst_44 {dimension_numbers = #tpu.dot_dimension_numbers<[1], [0], [0], [1], [0, 0, 1, 1], [], []>} : vector<8x4xbf16>, vector<4x288xbf16>, vector<8x288xf32> -> vector<8x288xf32>
    %63 = arith.addf %58, %62 : vector<8x288xf32>
    %64 = vector.extract_strided_slice %52 {offsets = [0, 2], sizes = [4, 288], strides = [1, 1]} : vector<4x326xbf16> to vector<4x288xbf16>
    %c2_45 = arith.constant 2 : index
    %c0_46 = arith.constant 0 : index
    %c0_47 = arith.constant 0 : index
    %65 = vector.load %arg1[%c2_45, %c0_46, %c0_47] : memref<9x8x4xbf16, #tpu.memory_space<vmem>>, vector<1x8x4xbf16>
    %66 = vector.shape_cast %65 : vector<1x8x4xbf16> to vector<8x4xbf16>
    %cst_48 = arith.constant dense<0.000000e+00> : vector<8x288xf32>
    %67 = tpu.matmul %66, %64, %cst_48 {dimension_numbers = #tpu.dot_dimension_numbers<[1], [0], [0], [1], [0, 0, 1, 1], [], []>} : vector<8x4xbf16>, vector<4x288xbf16>, vector<8x288xf32> -> vector<8x288xf32>
    %68 = arith.addf %63, %67 : vector<8x288xf32>
    %69 = vector.extract_strided_slice %52 {offsets = [0, 18], sizes = [4, 288], strides = [1, 1]} : vector<4x326xbf16> to vector<4x288xbf16>
    %c3_49 = arith.constant 3 : index
    %c0_50 = arith.constant 0 : index
    %c0_51 = arith.constant 0 : index
    %70 = vector.load %arg1[%c3_49, %c0_50, %c0_51] : memref<9x8x4xbf16, #tpu.memory_space<vmem>>, vector<1x8x4xbf16>
    %71 = vector.shape_cast %70 : vector<1x8x4xbf16> to vector<8x4xbf16>
    %cst_52 = arith.constant dense<0.000000e+00> : vector<8x288xf32>
    %72 = tpu.matmul %71, %69, %cst_52 {dimension_numbers = #tpu.dot_dimension_numbers<[1], [0], [0], [1], [0, 0, 1, 1], [], []>} : vector<8x4xbf16>, vector<4x288xbf16>, vector<8x288xf32> -> vector<8x288xf32>
    %73 = arith.addf %68, %72 : vector<8x288xf32>
    %74 = vector.extract_strided_slice %52 {offsets = [0, 19], sizes = [4, 288], strides = [1, 1]} : vector<4x326xbf16> to vector<4x288xbf16>
    %c4_53 = arith.constant 4 : index
    %c0_54 = arith.constant 0 : index
    %c0_55 = arith.constant 0 : index
    %75 = vector.load %arg1[%c4_53, %c0_54, %c0_55] : memref<9x8x4xbf16, #tpu.memory_space<vmem>>, vector<1x8x4xbf16>
    %76 = vector.shape_cast %75 : vector<1x8x4xbf16> to vector<8x4xbf16>
    %cst_56 = arith.constant dense<0.000000e+00> : vector<8x288xf32>
    %77 = tpu.matmul %76, %74, %cst_56 {dimension_numbers = #tpu.dot_dimension_numbers<[1], [0], [0], [1], [0, 0, 1, 1], [], []>} : vector<8x4xbf16>, vector<4x288xbf16>, vector<8x288xf32> -> vector<8x288xf32>
    %78 = arith.addf %73, %77 : vector<8x288xf32>
    %79 = vector.extract_strided_slice %52 {offsets = [0, 20], sizes = [4, 288], strides = [1, 1]} : vector<4x326xbf16> to vector<4x288xbf16>
    %c5_57 = arith.constant 5 : index
    %c0_58 = arith.constant 0 : index
    %c0_59 = arith.constant 0 : index
    %80 = vector.load %arg1[%c5_57, %c0_58, %c0_59] : memref<9x8x4xbf16, #tpu.memory_space<vmem>>, vector<1x8x4xbf16>
    %81 = vector.shape_cast %80 : vector<1x8x4xbf16> to vector<8x4xbf16>
    %cst_60 = arith.constant dense<0.000000e+00> : vector<8x288xf32>
    %82 = tpu.matmul %81, %79, %cst_60 {dimension_numbers = #tpu.dot_dimension_numbers<[1], [0], [0], [1], [0, 0, 1, 1], [], []>} : vector<8x4xbf16>, vector<4x288xbf16>, vector<8x288xf32> -> vector<8x288xf32>
    %83 = arith.addf %78, %82 : vector<8x288xf32>
    %84 = vector.extract_strided_slice %52 {offsets = [0, 36], sizes = [4, 288], strides = [1, 1]} : vector<4x326xbf16> to vector<4x288xbf16>
    %c6_61 = arith.constant 6 : index
    %c0_62 = arith.constant 0 : index
    %c0_63 = arith.constant 0 : index
    %85 = vector.load %arg1[%c6_61, %c0_62, %c0_63] : memref<9x8x4xbf16, #tpu.memory_space<vmem>>, vector<1x8x4xbf16>
    %86 = vector.shape_cast %85 : vector<1x8x4xbf16> to vector<8x4xbf16>
    %cst_64 = arith.constant dense<0.000000e+00> : vector<8x288xf32>
    %87 = tpu.matmul %86, %84, %cst_64 {dimension_numbers = #tpu.dot_dimension_numbers<[1], [0], [0], [1], [0, 0, 1, 1], [], []>} : vector<8x4xbf16>, vector<4x288xbf16>, vector<8x288xf32> -> vector<8x288xf32>
    %88 = arith.addf %83, %87 : vector<8x288xf32>
    %89 = vector.extract_strided_slice %52 {offsets = [0, 37], sizes = [4, 288], strides = [1, 1]} : vector<4x326xbf16> to vector<4x288xbf16>
    %c7_65 = arith.constant 7 : index
    %c0_66 = arith.constant 0 : index
    %c0_67 = arith.constant 0 : index
    %90 = vector.load %arg1[%c7_65, %c0_66, %c0_67] : memref<9x8x4xbf16, #tpu.memory_space<vmem>>, vector<1x8x4xbf16>
    %91 = vector.shape_cast %90 : vector<1x8x4xbf16> to vector<8x4xbf16>
    %cst_68 = arith.constant dense<0.000000e+00> : vector<8x288xf32>
    %92 = tpu.matmul %91, %89, %cst_68 {dimension_numbers = #tpu.dot_dimension_numbers<[1], [0], [0], [1], [0, 0, 1, 1], [], []>} : vector<8x4xbf16>, vector<4x288xbf16>, vector<8x288xf32> -> vector<8x288xf32>
    %93 = arith.addf %88, %92 : vector<8x288xf32>
    %94 = vector.extract_strided_slice %52 {offsets = [0, 38], sizes = [4, 288], strides = [1, 1]} : vector<4x326xbf16> to vector<4x288xbf16>
    %c8_69 = arith.constant 8 : index
    %c0_70 = arith.constant 0 : index
    %c0_71 = arith.constant 0 : index
    %95 = vector.load %arg1[%c8_69, %c0_70, %c0_71] : memref<9x8x4xbf16, #tpu.memory_space<vmem>>, vector<1x8x4xbf16>
    %96 = vector.shape_cast %95 : vector<1x8x4xbf16> to vector<8x4xbf16>
    %cst_72 = arith.constant dense<0.000000e+00> : vector<8x288xf32>
    %97 = tpu.matmul %96, %94, %cst_72 {dimension_numbers = #tpu.dot_dimension_numbers<[1], [0], [0], [1], [0, 0, 1, 1], [], []>} : vector<8x4xbf16>, vector<4x288xbf16>, vector<8x288xf32> -> vector<8x288xf32>
    %98 = arith.addf %93, %97 : vector<8x288xf32>
    %c1_73 = arith.constant 1 : index
    %c0_74 = arith.constant 0 : index
    %c0_75 = arith.constant 0 : index
    %99 = vector.load %arg3[%c1_73, %c0_74, %c0_75] : memref<2x8x288xf32, #tpu.memory_space<vmem>>, vector<1x8x288xf32>
    %100 = vector.shape_cast %99 : vector<1x8x288xf32> to vector<8x288xf32>
    %101 = vector.shape_cast %98 : vector<8x288xf32> to vector<1x8x288xf32>
    tpu.vector_store %arg3[%c1_73, %c0_74, %c0_75], %101 {strides = array<i32>} : memref<2x8x288xf32, #tpu.memory_space<vmem>>, vector<1x8x288xf32>,
    return
  }
  func.func @transform_0(%arg0: i32) -> (i32, i32, i32) {
    %c0_i32 = arith.constant 0 : i32
    %c0_i32_0 = arith.constant 0 : i32
    %c0_i32_1 = arith.constant 0 : i32
    %c0_i32_2 = arith.constant 0 : i32
    return %c0_i32, %c0_i32_0, %c0_i32_1 : i32, i32, i32
  }
  func.func @transform_1(%arg0: i32) -> (i32, i32, i32) {
    %c0_i32 = arith.constant 0 : i32
    %c0_i32_0 = arith.constant 0 : i32
    %c0_i32_1 = arith.constant 0 : i32
    return %arg0, %c0_i32, %c0_i32_0 : i32, i32, i32
  }
  func.func @transform_2(%arg0: i32) -> (i32, i32, i32) {
    %c0_i32 = arith.constant 0 : i32
    %c0_i32_0 = arith.constant 0 : i32
    %c0_i32_1 = arith.constant 0 : i32
    return %arg0, %c0_i32, %c0_i32_0 : i32, i32, i32
  }
}

</mosaic_0001>

<llo_original>
// kernel: _lambda_.1
$region0: #{_lambda_.1}
  #allocation0 [shape = 'u32[]', space=smem, size = 0x4, offset = 0x4, fixed_abs, tag = 'smem constant byte address 0x4 - core index']
  #allocation1 [shape = 'u32[72,128]{1,0:T(1,128)}', space=vmem, size = 0x9000, scoped, tag = 'internal scratch']
  %s0 = inlined_call_operand.vmem [shape: bf16[9,8,4], index: 0, kind: input, shape index: {}]
  %s1 = inlined_call_operand.vmem [shape: bf16[2,4,326], index: 1, kind: input, shape index: {}]
  %s2 = inlined_call_operand.vmem [shape: f32[2,8,288], index: 2, kind: output, shape index: {}]
  %s3 = sld [smem:[#allocation0]]
  $region18: #{_lambda_.1} parent=0
    _
  %s5 = ssub.s32 1, %s3
  %s6 = scalar_select 0, %s5, %s3
  // Predicated region
  $region2: #{_lambda_.1} parent=0 // pred_check
    _
  $region3: #{_lambda_.1} parent=0 // pred_check_branch
    %8 = sbr.rel (0) target = $region5
  $region4: #{_lambda_.1} parent=0 // pred_region
    _
  $region5: #{_lambda_.1} parent=0 // pred_fallthru
    _
  // Predicated region
  $region6: #{_lambda_.1} parent=0 // pred_check
    _
  $region7: #{_lambda_.1} parent=0 // pred_check_branch
    %10 = sbr.rel (0) target = $region9
  $region8: #{_lambda_.1} parent=0 // pred_region
    _
  $region9: #{_lambda_.1} parent=0 // pred_fallthru
    _
  %v12 = vld [vmem:[%s1] sm:$0x3f]
  %v13 = vld [vmem:[%s0] sm:$0xf]
  %s14 = scalar_lea.vmem %s0, 4
  %v15 = vld [vmem:[%s14] sm:$0xf]
  %17 = vst [vmem:[#allocation1] ss:$4 sm:$0xff] %v12
  %v18 = vld.sshfl [vmem:[#allocation1] sm:$0xff pattern:$0x73625140]
  %v20 = vld.sshfl [vmem:[#allocation1 + $0x8] sm:$0xff pattern:$0x73625140]
  %v22 = vld.sshfl [vmem:[#allocation1 + $0x10] sm:$0xff pattern:$0x73625140]
  %24 = vrot.lane.b32.xlu0 %v18, 127
  %v25 = vpop.permute.xlu0 %24
  %26 = vrot.lane.b32.xlu0 %v20, 127
  %v27 = vpop.permute.xlu0 %26
  %28 = vrot.lane.b32.xlu0 %v22, 127
  %v29 = vpop.permute.xlu0 %28
  %vm30 = vcmask 1039360
  %v31 = vsel %vm30, %v25, %v27
  %v32 = vsel %vm30, %v27, %v29
  %vm33 = vcmask 31744
  %v35 = vsel %vm33, %v15, 0
  %vm37 = vcmask 1041408
  %v39 = vsel %vm37, %v31, 0
  %v42 = vsel %vm37, %v32, 0
  %v45 = vsel %vm37, %v29, 0
  %47 = vmatpush.bf16.msra.mxu0 0
  %48 = vmatpush.bf16.msra.mxu0 0
  %49 = vmatpush.bf16.msra.mxu0 0
  %50 = vmatpush.bf16.msra.mxu0 0
  %51 = vmatpush.bf16.msra.mxu0 0
  %52 = vmatpush.bf16.msra.mxu0 0
  %53 = vmatpush.bf16.msra.mxu0 0
  %54 = vmatpush.bf16.msra.mxu0 %v39
  %55 = vmatmul.bf16.gmra.mxu0 %v35
  %v56 = vpop.f32.mrf.mxu0
  %v57 = vadd.f32 0.0, %v56
  %v58 = vpop.f32.mrf.mxu0
  %59 = vdwg.mxu0
  %60 = vmatpush.bf16.msra.mxu0 0
  %61 = vmatpush.bf16.msra.mxu0 0
  %62 = vmatpush.bf16.msra.mxu0 0
  %63 = vmatpush.bf16.msra.mxu0 0
  %64 = vmatpush.bf16.msra.mxu0 0
  %65 = vmatpush.bf16.msra.mxu0 0
  %66 = vmatpush.bf16.msra.mxu0 0
  %67 = vmatpush.bf16.msra.mxu0 %v42
  %68 = vmatmul.bf16.gmra.mxu0 %v35
  %v69 = vpop.f32.mrf.mxu0
  %v70 = vadd.f32 0.0, %v69
  %v71 = vpop.f32.mrf.mxu0
  %72 = vdwg.mxu0
  %73 = vmatpush.bf16.msra.mxu0 0
  %74 = vmatpush.bf16.msra.mxu0 0
  %75 = vmatpush.bf16.msra.mxu0 0
  %76 = vmatpush.bf16.msra.mxu0 0
  %77 = vmatpush.bf16.msra.mxu0 0
  %78 = vmatpush.bf16.msra.mxu0 0
  %79 = vmatpush.bf16.msra.mxu0 0
  %80 = vmatpush.bf16.msra.mxu0 %v45
  %81 = vmatmul.bf16.gmra.mxu0 %v35
  %v82 = vpop.f32.mrf.mxu0
  %v83 = vadd.f32 0.0, %v82
  %v84 = vpop.f32.mrf.mxu0
  %85 = vdwg.mxu0
  %86 = vst [vmem:[#allocation1] ss:$4 sm:$0xff] %v12
  %v87 = vld.sshfl [vmem:[#allocation1] sm:$0xff pattern:$0x73625140]
  %v88 = vld.sshfl [vmem:[#allocation1 + $0x8] sm:$0xff pattern:$0x73625140]
  %v89 = vld.sshfl [vmem:[#allocation1 + $0x10] sm:$0xff pattern:$0x73625140]
  %v91 = vsel %vm33, %v13, 0
  %v93 = vsel %vm37, %v87, 0
  %v95 = vsel %vm37, %v88, 0
  %v97 = vsel %vm37, %v89, 0
  %99 = vmatpush.bf16.msra.mxu0 0
  %100 = vmatpush.bf16.msra.mxu0 0
  %101 = vmatpush.bf16.msra.mxu0 0
  %102 = vmatpush.bf16.msra.mxu0 0
  %103 = vmatpush.bf16.msra.mxu0 0
  %104 = vmatpush.bf16.msra.mxu0 0
  %105 = vmatpush.bf16.msra.mxu0 0
  %106 = vmatpush.bf16.msra.mxu0 %v93
  %107 = vmatmul.bf16.gmra.mxu0 %v91
  %v108 = vpop.f32.mrf.mxu0
  %v109 = vadd.f32 %v57, %v108
  %v110 = vpop.f32.mrf.mxu0
  %111 = vdwg.mxu0
  %112 = vmatpush.bf16.msra.mxu0 0
  %113 = vmatpush.bf16.msra.mxu0 0
  %114 = vmatpush.bf16.msra.mxu0 0
  %115 = vmatpush.bf16.msra.mxu0 0
  %116 = vmatpush.bf16.msra.mxu0 0
  %117 = vmatpush.bf16.msra.mxu0 0
  %118 = vmatpush.bf16.msra.mxu0 0
  %119 = vmatpush.bf16.msra.mxu0 %v95
  %120 = vmatmul.bf16.gmra.mxu0 %v91
  %v121 = vpop.f32.mrf.mxu0
  %v122 = vadd.f32 %v70, %v121
  %v123 = vpop.f32.mrf.mxu0
  %124 = vdwg.mxu0
  %125 = vmatpush.bf16.msra.mxu0 0
  %126 = vmatpush.bf16.msra.mxu0 0
  %127 = vmatpush.bf16.msra.mxu0 0
  %128 = vmatpush.bf16.msra.mxu0 0
  %129 = vmatpush.bf16.msra.mxu0 0
  %130 = vmatpush.bf16.msra.mxu0 0
  %131 = vmatpush.bf16.msra.mxu0 0
  %132 = vmatpush.bf16.msra.mxu0 %v97
  %133 = vmatmul.bf16.gmra.mxu0 %v91
  %v134 = vpop.f32.mrf.mxu0
  %v135 = vadd.f32 %v83, %v134
  %v136 = vpop.f32.mrf.mxu0
  %137 = vdwg.mxu0
  %s138 = scalar_lea.vmem %s0, 8
  %v139 = vld [vmem:[%s138] sm:$0xf]
  %140 = vst [vmem:[#allocation1] ss:$4 sm:$0xff] %v12
  %v141 = vld.sshfl [vmem:[#allocation1] sm:$0xff pattern:$0x73625140]
  %v143 = vld.sshfl [vmem:[#allocation1 + $0x8] sm:$0xff pattern:$0x73625140]
  %v145 = vld.sshfl [vmem:[#allocation1 + $0x10] sm:$0xff pattern:$0x73625140]
  %147 = vrot.lane.b32.xlu0 %v141, 126
  %v148 = vpop.permute.xlu0 %147
  %149 = vrot.lane.b32.xlu0 %v143, 126
  %v150 = vpop.permute.xlu0 %149
  %151 = vrot.lane.b32.xlu0 %v145, 126
  %v152 = vpop.permute.xlu0 %151
  %vm153 = vcmask 1031168
  %v154 = vsel %vm153, %v148, %v150
  %v155 = vsel %vm153, %v150, %v152
  %v157 = vsel %vm33, %v139, 0
  %v160 = vsel %vm37, %v154, 0
  %v163 = vsel %vm37, %v155, 0
  %v166 = vsel %vm37, %v152, 0
  %168 = vmatpush.bf16.msra.mxu0 0
  %169 = vmatpush.bf16.msra.mxu0 0
  %170 = vmatpush.bf16.msra.mxu0 0
  %171 = vmatpush.bf16.msra.mxu0 0
  %172 = vmatpush.bf16.msra.mxu0 0
  %173 = vmatpush.bf16.msra.mxu0 0
  %174 = vmatpush.bf16.msra.mxu0 0
  %175 = vmatpush.bf16.msra.mxu0 %v160
  %176 = vmatmul.bf16.gmra.mxu0 %v157
  %v177 = vpop.f32.mrf.mxu0
  %v178 = vadd.f32 0.0, %v177
  %v179 = vpop.f32.mrf.mxu0
  %180 = vdwg.mxu0
  %181 = vmatpush.bf16.msra.mxu0 0
  %182 = vmatpush.bf16.msra.mxu0 0
  %183 = vmatpush.bf16.msra.mxu0 0
  %184 = vmatpush.bf16.msra.mxu0 0
  %185 = vmatpush.bf16.msra.mxu0 0
  %186 = vmatpush.bf16.msra.mxu0 0
  %187 = vmatpush.bf16.msra.mxu0 0
  %188 = vmatpush.bf16.msra.mxu0 %v163
  %189 = vmatmul.bf16.gmra.mxu0 %v157
  %v190 = vpop.f32.mrf.mxu0
  %v191 = vadd.f32 0.0, %v190
  %v192 = vpop.f32.mrf.mxu0
  %193 = vdwg.mxu0
  %194 = vmatpush.bf16.msra.mxu0 0
  %195 = vmatpush.bf16.msra.mxu0 0
  %196 = vmatpush.bf16.msra.mxu0 0
  %197 = vmatpush.bf16.msra.mxu0 0
  %198 = vmatpush.bf16.msra.mxu0 0
  %199 = vmatpush.bf16.msra.mxu0 0
  %200 = vmatpush.bf16.msra.mxu0 0
  %201 = vmatpush.bf16.msra.mxu0 %v166
  %202 = vmatmul.bf16.gmra.mxu0 %v157
  %v203 = vpop.f32.mrf.mxu0
  %v204 = vadd.f32 0.0, %v203
  %v205 = vpop.f32.mrf.mxu0
  %206 = vdwg.mxu0
  %v207 = vadd.f32 %v109, %v178
  %v208 = vadd.f32 %v122, %v191
  %v209 = vadd.f32 %v135, %v204
  %s210 = scalar_lea.vmem %s0, 12
  %v211 = vld [vmem:[%s210] sm:$0xf]
  %212 = vst [vmem:[#allocation1] ss:$4 sm:$0xff] %v12
  %v213 = vld.sshfl [vmem:[#allocation1] sm:$0xff pattern:$0x73625140]
  %v215 = vld.sshfl [vmem:[#allocation1 + $0x8] sm:$0xff pattern:$0x73625140]
  %v217 = vld.sshfl [vmem:[#allocation1 + $0x10] sm:$0xff pattern:$0x73625140]
  %219 = vrot.lane.b32.xlu0 %v213, 110
  %v220 = vpop.permute.xlu0 %219
  %221 = vrot.lane.b32.xlu0 %v215, 110
  %v222 = vpop.permute.xlu0 %221
  %223 = vrot.lane.b32.xlu0 %v217, 110
  %v224 = vpop.permute.xlu0 %223
  %vm225 = vcmask 900096
  %v226 = vsel %vm225, %v220, %v222
  %v227 = vsel %vm225, %v222, %v224
  %v229 = vsel %vm33, %v211, 0
  %v232 = vsel %vm37, %v226, 0
  %v235 = vsel %vm37, %v227, 0
  %v238 = vsel %vm37, %v224, 0
  %240 = vmatpush.bf16.msra.mxu0 0
  %241 = vmatpush.bf16.msra.mxu0 0
  %242 = vmatpush.bf16.msra.mxu0 0
  %243 = vmatpush.bf16.msra.mxu0 0
  %244 = vmatpush.bf16.msra.mxu0 0
  %245 = vmatpush.bf16.msra.mxu0 0
  %246 = vmatpush.bf16.msra.mxu0 0
  %247 = vmatpush.bf16.msra.mxu0 %v232
  %248 = vmatmul.bf16.gmra.mxu0 %v229
  %v249 = vpop.f32.mrf.mxu0
  %v250 = vadd.f32 0.0, %v249
  %v251 = vpop.f32.mrf.mxu0
  %252 = vdwg.mxu0
  %253 = vmatpush.bf16.msra.mxu0 0
  %254 = vmatpush.bf16.msra.mxu0 0
  %255 = vmatpush.bf16.msra.mxu0 0
  %256 = vmatpush.bf16.msra.mxu0 0
  %257 = vmatpush.bf16.msra.mxu0 0
  %258 = vmatpush.bf16.msra.mxu0 0
  %259 = vmatpush.bf16.msra.mxu0 0
  %260 = vmatpush.bf16.msra.mxu0 %v235
  %261 = vmatmul.bf16.gmra.mxu0 %v229
  %v262 = vpop.f32.mrf.mxu0
  %v263 = vadd.f32 0.0, %v262
  %v264 = vpop.f32.mrf.mxu0
  %265 = vdwg.mxu0
  %266 = vmatpush.bf16.msra.mxu0 0
  %267 = vmatpush.bf16.msra.mxu0 0
  %268 = vmatpush.bf16.msra.mxu0 0
  %269 = vmatpush.bf16.msra.mxu0 0
  %270 = vmatpush.bf16.msra.mxu0 0
  %271 = vmatpush.bf16.msra.mxu0 0
  %272 = vmatpush.bf16.msra.mxu0 0
  %273 = vmatpush.bf16.msra.mxu0 %v238
  %274 = vmatmul.bf16.gmra.mxu0 %v229
  %v275 = vpop.f32.mrf.mxu0
  %v276 = vadd.f32 0.0, %v275
  %v277 = vpop.f32.mrf.mxu0
  %278 = vdwg.mxu0
  %v279 = vadd.f32 %v207, %v250
  %v280 = vadd.f32 %v208, %v263
  %v281 = vadd.f32 %v209, %v276
  %s282 = scalar_lea.vmem %s0, 16
  %v283 = vld [vmem:[%s282] sm:$0xf]
  %284 = vst [vmem:[#allocation1] ss:$4 sm:$0xff] %v12
  %v285 = vld.sshfl [vmem:[#allocation1] sm:$0xff pattern:$0x73625140]
  %v287 = vld.sshfl [vmem:[#allocation1 + $0x8] sm:$0xff pattern:$0x73625140]
  %v289 = vld.sshfl [vmem:[#allocation1 + $0x10] sm:$0xff pattern:$0x73625140]
  %291 = vrot.lane.b32.xlu0 %v285, 109
  %v292 = vpop.permute.xlu0 %291
  %293 = vrot.lane.b32.xlu0 %v287, 109
  %v294 = vpop.permute.xlu0 %293
  %295 = vrot.lane.b32.xlu0 %v289, 109
  %v296 = vpop.permute.xlu0 %295
  %vm297 = vcmask 891904
  %v298 = vsel %vm297, %v292, %v294
  %v299 = vsel %vm297, %v294, %v296
  %v301 = vsel %vm33, %v283, 0
  %v304 = vsel %vm37, %v298, 0
  %v307 = vsel %vm37, %v299, 0
  %v310 = vsel %vm37, %v296, 0
  %312 = vmatpush.bf16.msra.mxu0 0
  %313 = vmatpush.bf16.msra.mxu0 0
  %314 = vmatpush.bf16.msra.mxu0 0
  %315 = vmatpush.bf16.msra.mxu0 0
  %316 = vmatpush.bf16.msra.mxu0 0
  %317 = vmatpush.bf16.msra.mxu0 0
  %318 = vmatpush.bf16.msra.mxu0 0
  %319 = vmatpush.bf16.msra.mxu0 %v304
  %320 = vmatmul.bf16.gmra.mxu0 %v301
  %v321 = vpop.f32.mrf.mxu0
  %v322 = vadd.f32 0.0, %v321
  %v323 = vpop.f32.mrf.mxu0
  %324 = vdwg.mxu0
  %325 = vmatpush.bf16.msra.mxu0 0
  %326 = vmatpush.bf16.msra.mxu0 0
  %327 = vmatpush.bf16.msra.mxu0 0
  %328 = vmatpush.bf16.msra.mxu0 0
  %329 = vmatpush.bf16.msra.mxu0 0
  %330 = vmatpush.bf16.msra.mxu0 0
  %331 = vmatpush.bf16.msra.mxu0 0
  %332 = vmatpush.bf16.msra.mxu0 %v307
  %333 = vmatmul.bf16.gmra.mxu0 %v301
  %v334 = vpop.f32.mrf.mxu0
  %v335 = vadd.f32 0.0, %v334
  %v336 = vpop.f32.mrf.mxu0
  %337 = vdwg.mxu0
  %338 = vmatpush.bf16.msra.mxu0 0
  %339 = vmatpush.bf16.msra.mxu0 0
  %340 = vmatpush.bf16.msra.mxu0 0
  %341 = vmatpush.bf16.msra.mxu0 0
  %342 = vmatpush.bf16.msra.mxu0 0
  %343 = vmatpush.bf16.msra.mxu0 0
  %344 = vmatpush.bf16.msra.mxu0 0
  %345 = vmatpush.bf16.msra.mxu0 %v310
  %346 = vmatmul.bf16.gmra.mxu0 %v301
  %v347 = vpop.f32.mrf.mxu0
  %v348 = vadd.f32 0.0, %v347
  %v349 = vpop.f32.mrf.mxu0
  %350 = vdwg.mxu0
  %v351 = vadd.f32 %v279, %v322
  %v352 = vadd.f32 %v280, %v335
  %v353 = vadd.f32 %v281, %v348
  %s354 = scalar_lea.vmem %s0, 20
  %v355 = vld [vmem:[%s354] sm:$0xf]
  %356 = vst [vmem:[#allocation1] ss:$4 sm:$0xff] %v12
  %v357 = vld.sshfl [vmem:[#allocation1] sm:$0xff pattern:$0x73625140]
  %v359 = vld.sshfl [vmem:[#allocation1 + $0x8] sm:$0xff pattern:$0x73625140]
  %v361 = vld.sshfl [vmem:[#allocation1 + $0x10] sm:$0xff pattern:$0x73625140]
  %363 = vrot.lane.b32.xlu0 %v357, 108
  %v364 = vpop.permute.xlu0 %363
  %365 = vrot.lane.b32.xlu0 %v359, 108
  %v366 = vpop.permute.xlu0 %365
  %367 = vrot.lane.b32.xlu0 %v361, 108
  %v368 = vpop.permute.xlu0 %367
  %vm369 = vcmask 883712
  %v370 = vsel %vm369, %v364, %v366
  %v371 = vsel %vm369, %v366, %v368
  %v373 = vsel %vm33, %v355, 0
  %v376 = vsel %vm37, %v370, 0
  %v379 = vsel %vm37, %v371, 0
  %v382 = vsel %vm37, %v368, 0
  %384 = vmatpush.bf16.msra.mxu0 0
  %385 = vmatpush.bf16.msra.mxu0 0
  %386 = vmatpush.bf16.msra.mxu0 0
  %387 = vmatpush.bf16.msra.mxu0 0
  %388 = vmatpush.bf16.msra.mxu0 0
  %389 = vmatpush.bf16.msra.mxu0 0
  %390 = vmatpush.bf16.msra.mxu0 0
  %391 = vmatpush.bf16.msra.mxu0 %v376
  %392 = vmatmul.bf16.gmra.mxu0 %v373
  %v393 = vpop.f32.mrf.mxu0
  %v394 = vadd.f32 0.0, %v393
  %v395 = vpop.f32.mrf.mxu0
  %396 = vdwg.mxu0
  %397 = vmatpush.bf16.msra.mxu0 0
  %398 = vmatpush.bf16.msra.mxu0 0
  %399 = vmatpush.bf16.msra.mxu0 0
  %400 = vmatpush.bf16.msra.mxu0 0
  %401 = vmatpush.bf16.msra.mxu0 0
  %402 = vmatpush.bf16.msra.mxu0 0
  %403 = vmatpush.bf16.msra.mxu0 0
  %404 = vmatpush.bf16.msra.mxu0 %v379
  %405 = vmatmul.bf16.gmra.mxu0 %v373
  %v406 = vpop.f32.mrf.mxu0
  %v407 = vadd.f32 0.0, %v406
  %v408 = vpop.f32.mrf.mxu0
  %409 = vdwg.mxu0
  %410 = vmatpush.bf16.msra.mxu0 0
  %411 = vmatpush.bf16.msra.mxu0 0
  %412 = vmatpush.bf16.msra.mxu0 0
  %413 = vmatpush.bf16.msra.mxu0 0
  %414 = vmatpush.bf16.msra.mxu0 0
  %415 = vmatpush.bf16.msra.mxu0 0
  %416 = vmatpush.bf16.msra.mxu0 0
  %417 = vmatpush.bf16.msra.mxu0 %v382
  %418 = vmatmul.bf16.gmra.mxu0 %v373
  %v419 = vpop.f32.mrf.mxu0
  %v420 = vadd.f32 0.0, %v419
  %v421 = vpop.f32.mrf.mxu0
  %422 = vdwg.mxu0
  %v423 = vadd.f32 %v351, %v394
  %v424 = vadd.f32 %v352, %v407
  %v425 = vadd.f32 %v353, %v420
  %s426 = scalar_lea.vmem %s0, 24
  %v427 = vld [vmem:[%s426] sm:$0xf]
  %428 = vst [vmem:[#allocation1] ss:$4 sm:$0xff] %v12
  %v429 = vld.sshfl [vmem:[#allocation1] sm:$0xff pattern:$0x73625140]
  %v431 = vld.sshfl [vmem:[#allocation1 + $0x8] sm:$0xff pattern:$0x73625140]
  %v433 = vld.sshfl [vmem:[#allocation1 + $0x10] sm:$0xff pattern:$0x73625140]
  %435 = vrot.lane.b32.xlu0 %v429, 92
  %v436 = vpop.permute.xlu0 %435
  %437 = vrot.lane.b32.xlu0 %v431, 92
  %v438 = vpop.permute.xlu0 %437
  %439 = vrot.lane.b32.xlu0 %v433, 92
  %v440 = vpop.permute.xlu0 %439
  %vm441 = vcmask 752640
  %v442 = vsel %vm441, %v436, %v438
  %v443 = vsel %vm441, %v438, %v440
  %v445 = vsel %vm33, %v427, 0
  %v448 = vsel %vm37, %v442, 0
  %v451 = vsel %vm37, %v443, 0
  %v454 = vsel %vm37, %v440, 0
  %456 = vmatpush.bf16.msra.mxu0 0
  %457 = vmatpush.bf16.msra.mxu0 0
  %458 = vmatpush.bf16.msra.mxu0 0
  %459 = vmatpush.bf16.msra.mxu0 0
  %460 = vmatpush.bf16.msra.mxu0 0
  %461 = vmatpush.bf16.msra.mxu0 0
  %462 = vmatpush.bf16.msra.mxu0 0
  %463 = vmatpush.bf16.msra.mxu0 %v448
  %464 = vmatmul.bf16.gmra.mxu0 %v445
  %v465 = vpop.f32.mrf.mxu0
  %v466 = vadd.f32 0.0, %v465
  %v467 = vpop.f32.mrf.mxu0
  %468 = vdwg.mxu0
  %469 = vmatpush.bf16.msra.mxu0 0
  %470 = vmatpush.bf16.msra.mxu0 0
  %471 = vmatpush.bf16.msra.mxu0 0
  %472 = vmatpush.bf16.msra.mxu0 0
  %473 = vmatpush.bf16.msra.mxu0 0
  %474 = vmatpush.bf16.msra.mxu0 0
  %475 = vmatpush.bf16.msra.mxu0 0
  %476 = vmatpush.bf16.msra.mxu0 %v451
  %477 = vmatmul.bf16.gmra.mxu0 %v445
  %v478 = vpop.f32.mrf.mxu0
  %v479 = vadd.f32 0.0, %v478
  %v480 = vpop.f32.mrf.mxu0
  %481 = vdwg.mxu0
  %482 = vmatpush.bf16.msra.mxu0 0
  %483 = vmatpush.bf16.msra.mxu0 0
  %484 = vmatpush.bf16.msra.mxu0 0
  %485 = vmatpush.bf16.msra.mxu0 0
  %486 = vmatpush.bf16.msra.mxu0 0
  %487 = vmatpush.bf16.msra.mxu0 0
  %488 = vmatpush.bf16.msra.mxu0 0
  %489 = vmatpush.bf16.msra.mxu0 %v454
  %490 = vmatmul.bf16.gmra.mxu0 %v445
  %v491 = vpop.f32.mrf.mxu0
  %v492 = vadd.f32 0.0, %v491
  %v493 = vpop.f32.mrf.mxu0
  %494 = vdwg.mxu0
  %v495 = vadd.f32 %v423, %v466
  %v496 = vadd.f32 %v424, %v479
  %v497 = vadd.f32 %v425, %v492
  %s498 = scalar_lea.vmem %s0, 28
  %v499 = vld [vmem:[%s498] sm:$0xf]
  %500 = vst [vmem:[#allocation1] ss:$4 sm:$0xff] %v12
  %v501 = vld.sshfl [vmem:[#allocation1] sm:$0xff pattern:$0x73625140]
  %v503 = vld.sshfl [vmem:[#allocation1 + $0x8] sm:$0xff pattern:$0x73625140]
  %v505 = vld.sshfl [vmem:[#allocation1 + $0x10] sm:$0xff pattern:$0x73625140]
  %507 = vrot.lane.b32.xlu0 %v501, 91
  %v508 = vpop.permute.xlu0 %507
  %509 = vrot.lane.b32.xlu0 %v503, 91
  %v510 = vpop.permute.xlu0 %509
  %511 = vrot.lane.b32.xlu0 %v505, 91
  %v512 = vpop.permute.xlu0 %511
  %vm513 = vcmask 744448
  %v514 = vsel %vm513, %v508, %v510
  %v515 = vsel %vm513, %v510, %v512
  %v517 = vsel %vm33, %v499, 0
  %v520 = vsel %vm37, %v514, 0
  %v523 = vsel %vm37, %v515, 0
  %v526 = vsel %vm37, %v512, 0
  %528 = vmatpush.bf16.msra.mxu0 0
  %529 = vmatpush.bf16.msra.mxu0 0
  %530 = vmatpush.bf16.msra.mxu0 0
  %531 = vmatpush.bf16.msra.mxu0 0
  %532 = vmatpush.bf16.msra.mxu0 0
  %533 = vmatpush.bf16.msra.mxu0 0
  %534 = vmatpush.bf16.msra.mxu0 0
  %535 = vmatpush.bf16.msra.mxu0 %v520
  %536 = vmatmul.bf16.gmra.mxu0 %v517
  %v537 = vpop.f32.mrf.mxu0
  %v538 = vadd.f32 0.0, %v537
  %v539 = vpop.f32.mrf.mxu0
  %540 = vdwg.mxu0
  %541 = vmatpush.bf16.msra.mxu0 0
  %542 = vmatpush.bf16.msra.mxu0 0
  %543 = vmatpush.bf16.msra.mxu0 0
  %544 = vmatpush.bf16.msra.mxu0 0
  %545 = vmatpush.bf16.msra.mxu0 0
  %546 = vmatpush.bf16.msra.mxu0 0
  %547 = vmatpush.bf16.msra.mxu0 0
  %548 = vmatpush.bf16.msra.mxu0 %v523
  %549 = vmatmul.bf16.gmra.mxu0 %v517
  %v550 = vpop.f32.mrf.mxu0
  %v551 = vadd.f32 0.0, %v550
  %v552 = vpop.f32.mrf.mxu0
  %553 = vdwg.mxu0
  %554 = vmatpush.bf16.msra.mxu0 0
  %555 = vmatpush.bf16.msra.mxu0 0
  %556 = vmatpush.bf16.msra.mxu0 0
  %557 = vmatpush.bf16.msra.mxu0 0
  %558 = vmatpush.bf16.msra.mxu0 0
  %559 = vmatpush.bf16.msra.mxu0 0
  %560 = vmatpush.bf16.msra.mxu0 0
  %561 = vmatpush.bf16.msra.mxu0 %v526
  %562 = vmatmul.bf16.gmra.mxu0 %v517
  %v563 = vpop.f32.mrf.mxu0
  %v564 = vadd.f32 0.0, %v563
  %v565 = vpop.f32.mrf.mxu0
  %566 = vdwg.mxu0
  %v567 = vadd.f32 %v495, %v538
  %v568 = vadd.f32 %v496, %v551
  %v569 = vadd.f32 %v497, %v564
  %s570 = scalar_lea.vmem %s0, 32
  %v571 = vld [vmem:[%s570] sm:$0xf]
  %572 = vst [vmem:[#allocation1] ss:$4 sm:$0xff] %v12
  %v573 = vld.sshfl [vmem:[#allocation1] sm:$0xff pattern:$0x73625140]
  %v575 = vld.sshfl [vmem:[#allocation1 + $0x8] sm:$0xff pattern:$0x73625140]
  %v577 = vld.sshfl [vmem:[#allocation1 + $0x10] sm:$0xff pattern:$0x73625140]
  %579 = vrot.lane.b32.xlu0 %v573, 90
  %v580 = vpop.permute.xlu0 %579
  %581 = vrot.lane.b32.xlu0 %v575, 90
  %v582 = vpop.permute.xlu0 %581
  %583 = vrot.lane.b32.xlu0 %v577, 90
  %v584 = vpop.permute.xlu0 %583
  %vm585 = vcmask 736256
  %v586 = vsel %vm585, %v580, %v582
  %v587 = vsel %vm585, %v582, %v584
  %v589 = vsel %vm33, %v571, 0
  %v592 = vsel %vm37, %v586, 0
  %v595 = vsel %vm37, %v587, 0
  %v598 = vsel %vm37, %v584, 0
  %600 = vmatpush.bf16.msra.mxu0 0
  %601 = vmatpush.bf16.msra.mxu0 0
  %602 = vmatpush.bf16.msra.mxu0 0
  %603 = vmatpush.bf16.msra.mxu0 0
  %604 = vmatpush.bf16.msra.mxu0 0
  %605 = vmatpush.bf16.msra.mxu0 0
  %606 = vmatpush.bf16.msra.mxu0 0
  %607 = vmatpush.bf16.msra.mxu0 %v592
  %608 = vmatmul.bf16.gmra.mxu0 %v589
  %v609 = vpop.f32.mrf.mxu0
  %v610 = vadd.f32 0.0, %v609
  %v611 = vpop.f32.mrf.mxu0
  %612 = vdwg.mxu0
  %613 = vmatpush.bf16.msra.mxu0 0
  %614 = vmatpush.bf16.msra.mxu0 0
  %615 = vmatpush.bf16.msra.mxu0 0
  %616 = vmatpush.bf16.msra.mxu0 0
  %617 = vmatpush.bf16.msra.mxu0 0
  %618 = vmatpush.bf16.msra.mxu0 0
  %619 = vmatpush.bf16.msra.mxu0 0
  %620 = vmatpush.bf16.msra.mxu0 %v595
  %621 = vmatmul.bf16.gmra.mxu0 %v589
  %v622 = vpop.f32.mrf.mxu0
  %v623 = vadd.f32 0.0, %v622
  %v624 = vpop.f32.mrf.mxu0
  %625 = vdwg.mxu0
  %626 = vmatpush.bf16.msra.mxu0 0
  %627 = vmatpush.bf16.msra.mxu0 0
  %628 = vmatpush.bf16.msra.mxu0 0
  %629 = vmatpush.bf16.msra.mxu0 0
  %630 = vmatpush.bf16.msra.mxu0 0
  %631 = vmatpush.bf16.msra.mxu0 0
  %632 = vmatpush.bf16.msra.mxu0 0
  %633 = vmatpush.bf16.msra.mxu0 %v598
  %634 = vmatmul.bf16.gmra.mxu0 %v589
  %v635 = vpop.f32.mrf.mxu0
  %v636 = vadd.f32 0.0, %v635
  %v637 = vpop.f32.mrf.mxu0
  %638 = vdwg.mxu0
  %v639 = vadd.f32 %v567, %v610
  %v640 = vadd.f32 %v568, %v623
  %v641 = vadd.f32 %v569, %v636
  %642 = vst [vmem:[%s2] sm:$0xff] %v639
  %643 = vst [vmem:[%s2 + $0x8] sm:$0xff] %v640
  %vm644 = vcmask 261120
  %645 = vst.msk [vmem:[%s2 + $0x10] sm:$0xff] %vm644, %v641
  %s646 = scalar_lea.vmem %s1, 6
  %v647 = vld [vmem:[%s646] sm:$0x3f]
  %v648 = vld [vmem:[%s0] sm:$0xf]
  %v649 = vld [vmem:[%s14] sm:$0xf]
  %651 = vst [vmem:[#allocation1] ss:$4 sm:$0xff] %v647
  %v652 = vld.sshfl [vmem:[#allocation1] sm:$0xff pattern:$0x73625140]
  %v654 = vld.sshfl [vmem:[#allocation1 + $0x8] sm:$0xff pattern:$0x73625140]
  %v656 = vld.sshfl [vmem:[#allocation1 + $0x10] sm:$0xff pattern:$0x73625140]
  %658 = vrot.lane.b32.xlu0 %v652, 127
  %v659 = vpop.permute.xlu0 %658
  %660 = vrot.lane.b32.xlu0 %v654, 127
  %v661 = vpop.permute.xlu0 %660
  %662 = vrot.lane.b32.xlu0 %v656, 127
  %v663 = vpop.permute.xlu0 %662
  %v664 = vsel %vm30, %v659, %v661
  %v665 = vsel %vm30, %v661, %v663
  %v667 = vsel %vm33, %v649, 0
  %v670 = vsel %vm37, %v664, 0
  %v673 = vsel %vm37, %v665, 0
  %v676 = vsel %vm37, %v663, 0
  %678 = vmatpush.bf16.msra.mxu0 0
  %679 = vmatpush.bf16.msra.mxu0 0
  %680 = vmatpush.bf16.msra.mxu0 0
  %681 = vmatpush.bf16.msra.mxu0 0
  %682 = vmatpush.bf16.msra.mxu0 0
  %683 = vmatpush.bf16.msra.mxu0 0
  %684 = vmatpush.bf16.msra.mxu0 0
  %685 = vmatpush.bf16.msra.mxu0 %v670
  %686 = vmatmul.bf16.gmra.mxu0 %v667
  %v687 = vpop.f32.mrf.mxu0
  %v688 = vadd.f32 0.0, %v687
  %v689 = vpop.f32.mrf.mxu0
  %690 = vdwg.mxu0
  %691 = vmatpush.bf16.msra.mxu0 0
  %692 = vmatpush.bf16.msra.mxu0 0
  %693 = vmatpush.bf16.msra.mxu0 0
  %694 = vmatpush.bf16.msra.mxu0 0
  %695 = vmatpush.bf16.msra.mxu0 0
  %696 = vmatpush.bf16.msra.mxu0 0
  %697 = vmatpush.bf16.msra.mxu0 0
  %698 = vmatpush.bf16.msra.mxu0 %v673
  %699 = vmatmul.bf16.gmra.mxu0 %v667
  %v700 = vpop.f32.mrf.mxu0
  %v701 = vadd.f32 0.0, %v700
  %v702 = vpop.f32.mrf.mxu0
  %703 = vdwg.mxu0
  %704 = vmatpush.bf16.msra.mxu0 0
  %705 = vmatpush.bf16.msra.mxu0 0
  %706 = vmatpush.bf16.msra.mxu0 0
  %707 = vmatpush.bf16.msra.mxu0 0
  %708 = vmatpush.bf16.msra.mxu0 0
  %709 = vmatpush.bf16.msra.mxu0 0
  %710 = vmatpush.bf16.msra.mxu0 0
  %711 = vmatpush.bf16.msra.mxu0 %v676
  %712 = vmatmul.bf16.gmra.mxu0 %v667
  %v713 = vpop.f32.mrf.mxu0
  %v714 = vadd.f32 0.0, %v713
  %v715 = vpop.f32.mrf.mxu0
  %716 = vdwg.mxu0
  %717 = vst [vmem:[#allocation1] ss:$4 sm:$0xff] %v647
  %v718 = vld.sshfl [vmem:[#allocation1] sm:$0xff pattern:$0x73625140]
  %v719 = vld.sshfl [vmem:[#allocation1 + $0x8] sm:$0xff pattern:$0x73625140]
  %v720 = vld.sshfl [vmem:[#allocation1 + $0x10] sm:$0xff pattern:$0x73625140]
  %v722 = vsel %vm33, %v648, 0
  %v724 = vsel %vm37, %v718, 0
  %v726 = vsel %vm37, %v719, 0
  %v728 = vsel %vm37, %v720, 0
  %730 = vmatpush.bf16.msra.mxu0 0
  %731 = vmatpush.bf16.msra.mxu0 0
  %732 = vmatpush.bf16.msra.mxu0 0
  %733 = vmatpush.bf16.msra.mxu0 0
  %734 = vmatpush.bf16.msra.mxu0 0
  %735 = vmatpush.bf16.msra.mxu0 0
  %736 = vmatpush.bf16.msra.mxu0 0
  %737 = vmatpush.bf16.msra.mxu0 %v724
  %738 = vmatmul.bf16.gmra.mxu0 %v722
  %v739 = vpop.f32.mrf.mxu0
  %v740 = vadd.f32 %v688, %v739
  %v741 = vpop.f32.mrf.mxu0
  %742 = vdwg.mxu0
  %743 = vmatpush.bf16.msra.mxu0 0
  %744 = vmatpush.bf16.msra.mxu0 0
  %745 = vmatpush.bf16.msra.mxu0 0
  %746 = vmatpush.bf16.msra.mxu0 0
  %747 = vmatpush.bf16.msra.mxu0 0
  %748 = vmatpush.bf16.msra.mxu0 0
  %749 = vmatpush.bf16.msra.mxu0 0
  %750 = vmatpush.bf16.msra.mxu0 %v726
  %751 = vmatmul.bf16.gmra.mxu0 %v722
  %v752 = vpop.f32.mrf.mxu0
  %v753 = vadd.f32 %v701, %v752
  %v754 = vpop.f32.mrf.mxu0
  %755 = vdwg.mxu0
  %756 = vmatpush.bf16.msra.mxu0 0
  %757 = vmatpush.bf16.msra.mxu0 0
  %758 = vmatpush.bf16.msra.mxu0 0
  %759 = vmatpush.bf16.msra.mxu0 0
  %760 = vmatpush.bf16.msra.mxu0 0
  %761 = vmatpush.bf16.msra.mxu0 0
  %762 = vmatpush.bf16.msra.mxu0 0
  %763 = vmatpush.bf16.msra.mxu0 %v728
  %764 = vmatmul.bf16.gmra.mxu0 %v722
  %v765 = vpop.f32.mrf.mxu0
  %v766 = vadd.f32 %v714, %v765
  %v767 = vpop.f32.mrf.mxu0
  %768 = vdwg.mxu0
  %v769 = vld [vmem:[%s138] sm:$0xf]
  %770 = vst [vmem:[#allocation1] ss:$4 sm:$0xff] %v647
  %v771 = vld.sshfl [vmem:[#allocation1] sm:$0xff pattern:$0x73625140]
  %v773 = vld.sshfl [vmem:[#allocation1 + $0x8] sm:$0xff pattern:$0x73625140]
  %v775 = vld.sshfl [vmem:[#allocation1 + $0x10] sm:$0xff pattern:$0x73625140]
  %777 = vrot.lane.b32.xlu0 %v771, 126
  %v778 = vpop.permute.xlu0 %777
  %779 = vrot.lane.b32.xlu0 %v773, 126
  %v780 = vpop.permute.xlu0 %779
  %781 = vrot.lane.b32.xlu0 %v775, 126
  %v782 = vpop.permute.xlu0 %781
  %v783 = vsel %vm153, %v778, %v780
  %v784 = vsel %vm153, %v780, %v782
  %v786 = vsel %vm33, %v769, 0
  %v789 = vsel %vm37, %v783, 0
  %v792 = vsel %vm37, %v784, 0
  %v795 = vsel %vm37, %v782, 0
  %797 = vmatpush.bf16.msra.mxu0 0
  %798 = vmatpush.bf16.msra.mxu0 0
  %799 = vmatpush.bf16.msra.mxu0 0
  %800 = vmatpush.bf16.msra.mxu0 0
  %801 = vmatpush.bf16.msra.mxu0 0
  %802 = vmatpush.bf16.msra.mxu0 0
  %803 = vmatpush.bf16.msra.mxu0 0
  %804 = vmatpush.bf16.msra.mxu0 %v789
  %805 = vmatmul.bf16.gmra.mxu0 %v786
  %v806 = vpop.f32.mrf.mxu0
  %v807 = vadd.f32 0.0, %v806
  %v808 = vpop.f32.mrf.mxu0
  %809 = vdwg.mxu0
  %810 = vmatpush.bf16.msra.mxu0 0
  %811 = vmatpush.bf16.msra.mxu0 0
  %812 = vmatpush.bf16.msra.mxu0 0
  %813 = vmatpush.bf16.msra.mxu0 0
  %814 = vmatpush.bf16.msra.mxu0 0
  %815 = vmatpush.bf16.msra.mxu0 0
  %816 = vmatpush.bf16.msra.mxu0 0
  %817 = vmatpush.bf16.msra.mxu0 %v792
  %818 = vmatmul.bf16.gmra.mxu0 %v786
  %v819 = vpop.f32.mrf.mxu0
  %v820 = vadd.f32 0.0, %v819
  %v821 = vpop.f32.mrf.mxu0
  %822 = vdwg.mxu0
  %823 = vmatpush.bf16.msra.mxu0 0
  %824 = vmatpush.bf16.msra.mxu0 0
  %825 = vmatpush.bf16.msra.mxu0 0
  %826 = vmatpush.bf16.msra.mxu0 0
  %827 = vmatpush.bf16.msra.mxu0 0
  %828 = vmatpush.bf16.msra.mxu0 0
  %829 = vmatpush.bf16.msra.mxu0 0
  %830 = vmatpush.bf16.msra.mxu0 %v795
  %831 = vmatmul.bf16.gmra.mxu0 %v786
  %v832 = vpop.f32.mrf.mxu0
  %v833 = vadd.f32 0.0, %v832
  %v834 = vpop.f32.mrf.mxu0
  %835 = vdwg.mxu0
  %v836 = vadd.f32 %v740, %v807
  %v837 = vadd.f32 %v753, %v820
  %v838 = vadd.f32 %v766, %v833
  %v839 = vld [vmem:[%s210] sm:$0xf]
  %840 = vst [vmem:[#allocation1] ss:$4 sm:$0xff] %v647
  %v841 = vld.sshfl [vmem:[#allocation1] sm:$0xff pattern:$0x73625140]
  %v843 = vld.sshfl [vmem:[#allocation1 + $0x8] sm:$0xff pattern:$0x73625140]
  %v845 = vld.sshfl [vmem:[#allocation1 + $0x10] sm:$0xff pattern:$0x73625140]
  %847 = vrot.lane.b32.xlu0 %v841, 110
  %v848 = vpop.permute.xlu0 %847
  %849 = vrot.lane.b32.xlu0 %v843, 110
  %v850 = vpop.permute.xlu0 %849
  %851 = vrot.lane.b32.xlu0 %v845, 110
  %v852 = vpop.permute.xlu0 %851
  %v853 = vsel %vm225, %v848, %v850
  %v854 = vsel %vm225, %v850, %v852
  %v856 = vsel %vm33, %v839, 0
  %v859 = vsel %vm37, %v853, 0
  %v862 = vsel %vm37, %v854, 0
  %v865 = vsel %vm37, %v852, 0
  %867 = vmatpush.bf16.msra.mxu0 0
  %868 = vmatpush.bf16.msra.mxu0 0
  %869 = vmatpush.bf16.msra.mxu0 0
  %870 = vmatpush.bf16.msra.mxu0 0
  %871 = vmatpush.bf16.msra.mxu0 0
  %872 = vmatpush.bf16.msra.mxu0 0
  %873 = vmatpush.bf16.msra.mxu0 0
  %874 = vmatpush.bf16.msra.mxu0 %v859
  %875 = vmatmul.bf16.gmra.mxu0 %v856
  %v876 = vpop.f32.mrf.mxu0
  %v877 = vadd.f32 0.0, %v876
  %v878 = vpop.f32.mrf.mxu0
  %879 = vdwg.mxu0
  %880 = vmatpush.bf16.msra.mxu0 0
  %881 = vmatpush.bf16.msra.mxu0 0
  %882 = vmatpush.bf16.msra.mxu0 0
  %883 = vmatpush.bf16.msra.mxu0 0
  %884 = vmatpush.bf16.msra.mxu0 0
  %885 = vmatpush.bf16.msra.mxu0 0
  %886 = vmatpush.bf16.msra.mxu0 0
  %887 = vmatpush.bf16.msra.mxu0 %v862
  %888 = vmatmul.bf16.gmra.mxu0 %v856
  %v889 = vpop.f32.mrf.mxu0
  %v890 = vadd.f32 0.0, %v889
  %v891 = vpop.f32.mrf.mxu0
  %892 = vdwg.mxu0
  %893 = vmatpush.bf16.msra.mxu0 0
  %894 = vmatpush.bf16.msra.mxu0 0
  %895 = vmatpush.bf16.msra.mxu0 0
  %896 = vmatpush.bf16.msra.mxu0 0
  %897 = vmatpush.bf16.msra.mxu0 0
  %898 = vmatpush.bf16.msra.mxu0 0
  %899 = vmatpush.bf16.msra.mxu0 0
  %900 = vmatpush.bf16.msra.mxu0 %v865
  %901 = vmatmul.bf16.gmra.mxu0 %v856
  %v902 = vpop.f32.mrf.mxu0
  %v903 = vadd.f32 0.0, %v902
  %v904 = vpop.f32.mrf.mxu0
  %905 = vdwg.mxu0
  %v906 = vadd.f32 %v836, %v877
  %v907 = vadd.f32 %v837, %v890
  %v908 = vadd.f32 %v838, %v903
  %v909 = vld [vmem:[%s282] sm:$0xf]
  %910 = vst [vmem:[#allocation1] ss:$4 sm:$0xff] %v647
  %v911 = vld.sshfl [vmem:[#allocation1] sm:$0xff pattern:$0x73625140]
  %v913 = vld.sshfl [vmem:[#allocation1 + $0x8] sm:$0xff pattern:$0x73625140]
  %v915 = vld.sshfl [vmem:[#allocation1 + $0x10] sm:$0xff pattern:$0x73625140]
  %917 = vrot.lane.b32.xlu0 %v911, 109
  %v918 = vpop.permute.xlu0 %917
  %919 = vrot.lane.b32.xlu0 %v913, 109
  %v920 = vpop.permute.xlu0 %919
  %921 = vrot.lane.b32.xlu0 %v915, 109
  %v922 = vpop.permute.xlu0 %921
  %v923 = vsel %vm297, %v918, %v920
  %v924 = vsel %vm297, %v920, %v922
  %v926 = vsel %vm33, %v909, 0
  %v929 = vsel %vm37, %v923, 0
  %v932 = vsel %vm37, %v924, 0
  %v935 = vsel %vm37, %v922, 0
  %937 = vmatpush.bf16.msra.mxu0 0
  %938 = vmatpush.bf16.msra.mxu0 0
  %939 = vmatpush.bf16.msra.mxu0 0
  %940 = vmatpush.bf16.msra.mxu0 0
  %941 = vmatpush.bf16.msra.mxu0 0
  %942 = vmatpush.bf16.msra.mxu0 0
  %943 = vmatpush.bf16.msra.mxu0 0
  %944 = vmatpush.bf16.msra.mxu0 %v929
  %945 = vmatmul.bf16.gmra.mxu0 %v926
  %v946 = vpop.f32.mrf.mxu0
  %v947 = vadd.f32 0.0, %v946
  %v948 = vpop.f32.mrf.mxu0
  %949 = vdwg.mxu0
  %950 = vmatpush.bf16.msra.mxu0 0
  %951 = vmatpush.bf16.msra.mxu0 0
  %952 = vmatpush.bf16.msra.mxu0 0
  %953 = vmatpush.bf16.msra.mxu0 0
  %954 = vmatpush.bf16.msra.mxu0 0
  %955 = vmatpush.bf16.msra.mxu0 0
  %956 = vmatpush.bf16.msra.mxu0 0
  %957 = vmatpush.bf16.msra.mxu0 %v932
  %958 = vmatmul.bf16.gmra.mxu0 %v926
  %v959 = vpop.f32.mrf.mxu0
  %v960 = vadd.f32 0.0, %v959
  %v961 = vpop.f32.mrf.mxu0
  %962 = vdwg.mxu0
  %963 = vmatpush.bf16.msra.mxu0 0
  %964 = vmatpush.bf16.msra.mxu0 0
  %965 = vmatpush.bf16.msra.mxu0 0
  %966 = vmatpush.bf16.msra.mxu0 0
  %967 = vmatpush.bf16.msra.mxu0 0
  %968 = vmatpush.bf16.msra.mxu0 0
  %969 = vmatpush.bf16.msra.mxu0 0
  %970 = vmatpush.bf16.msra.mxu0 %v935
  %971 = vmatmul.bf16.gmra.mxu0 %v926
  %v972 = vpop.f32.mrf.mxu0
  %v973 = vadd.f32 0.0, %v972
  %v974 = vpop.f32.mrf.mxu0
  %975 = vdwg.mxu0
  %v976 = vadd.f32 %v906, %v947
  %v977 = vadd.f32 %v907, %v960
  %v978 = vadd.f32 %v908, %v973
  %v979 = vld [vmem:[%s354] sm:$0xf]
  %980 = vst [vmem:[#allocation1] ss:$4 sm:$0xff] %v647
  %v981 = vld.sshfl [vmem:[#allocation1] sm:$0xff pattern:$0x73625140]
  %v983 = vld.sshfl [vmem:[#allocation1 + $0x8] sm:$0xff pattern:$0x73625140]
  %v985 = vld.sshfl [vmem:[#allocation1 + $0x10] sm:$0xff pattern:$0x73625140]
  %987 = vrot.lane.b32.xlu0 %v981, 108
  %v988 = vpop.permute.xlu0 %987
  %989 = vrot.lane.b32.xlu0 %v983, 108
  %v990 = vpop.permute.xlu0 %989
  %991 = vrot.lane.b32.xlu0 %v985, 108
  %v992 = vpop.permute.xlu0 %991
  %v993 = vsel %vm369, %v988, %v990
  %v994 = vsel %vm369, %v990, %v992
  %v996 = vsel %vm33, %v979, 0
  %v999 = vsel %vm37, %v993, 0
  %v1002 = vsel %vm37, %v994, 0
  %v1005 = vsel %vm37, %v992, 0
  %1007 = vmatpush.bf16.msra.mxu0 0
  %1008 = vmatpush.bf16.msra.mxu0 0
  %1009 = vmatpush.bf16.msra.mxu0 0
  %1010 = vmatpush.bf16.msra.mxu0 0
  %1011 = vmatpush.bf16.msra.mxu0 0
  %1012 = vmatpush.bf16.msra.mxu0 0
  %1013 = vmatpush.bf16.msra.mxu0 0
  %1014 = vmatpush.bf16.msra.mxu0 %v999
  %1015 = vmatmul.bf16.gmra.mxu0 %v996
  %v1016 = vpop.f32.mrf.mxu0
  %v1017 = vadd.f32 0.0, %v1016
  %v1018 = vpop.f32.mrf.mxu0
  %1019 = vdwg.mxu0
  %1020 = vmatpush.bf16.msra.mxu0 0
  %1021 = vmatpush.bf16.msra.mxu0 0
  %1022 = vmatpush.bf16.msra.mxu0 0
  %1023 = vmatpush.bf16.msra.mxu0 0
  %1024 = vmatpush.bf16.msra.mxu0 0
  %1025 = vmatpush.bf16.msra.mxu0 0
  %1026 = vmatpush.bf16.msra.mxu0 0
  %1027 = vmatpush.bf16.msra.mxu0 %v1002
  %1028 = vmatmul.bf16.gmra.mxu0 %v996
  %v1029 = vpop.f32.mrf.mxu0
  %v1030 = vadd.f32 0.0, %v1029
  %v1031 = vpop.f32.mrf.mxu0
  %1032 = vdwg.mxu0
  %1033 = vmatpush.bf16.msra.mxu0 0
  %1034 = vmatpush.bf16.msra.mxu0 0
  %1035 = vmatpush.bf16.msra.mxu0 0
  %1036 = vmatpush.bf16.msra.mxu0 0
  %1037 = vmatpush.bf16.msra.mxu0 0
  %1038 = vmatpush.bf16.msra.mxu0 0
  %1039 = vmatpush.bf16.msra.mxu0 0
  %1040 = vmatpush.bf16.msra.mxu0 %v1005
  %1041 = vmatmul.bf16.gmra.mxu0 %v996
  %v1042 = vpop.f32.mrf.mxu0
  %v1043 = vadd.f32 0.0, %v1042
  %v1044 = vpop.f32.mrf.mxu0
  %1045 = vdwg.mxu0
  %v1046 = vadd.f32 %v976, %v1017
  %v1047 = vadd.f32 %v977, %v1030
  %v1048 = vadd.f32 %v978, %v1043
  %v1049 = vld [vmem:[%s426] sm:$0xf]
  %1050 = vst [vmem:[#allocation1] ss:$4 sm:$0xff] %v647
  %v1051 = vld.sshfl [vmem:[#allocation1] sm:$0xff pattern:$0x73625140]
  %v1053 = vld.sshfl [vmem:[#allocation1 + $0x8] sm:$0xff pattern:$0x73625140]
  %v1055 = vld.sshfl [vmem:[#allocation1 + $0x10] sm:$0xff pattern:$0x73625140]
  %1057 = vrot.lane.b32.xlu0 %v1051, 92
  %v1058 = vpop.permute.xlu0 %1057
  %1059 = vrot.lane.b32.xlu0 %v1053, 92
  %v1060 = vpop.permute.xlu0 %1059
  %1061 = vrot.lane.b32.xlu0 %v1055, 92
  %v1062 = vpop.permute.xlu0 %1061
  %v1063 = vsel %vm441, %v1058, %v1060
  %v1064 = vsel %vm441, %v1060, %v1062
  %v1066 = vsel %vm33, %v1049, 0
  %v1069 = vsel %vm37, %v1063, 0
  %v1072 = vsel %vm37, %v1064, 0
  %v1075 = vsel %vm37, %v1062, 0
  %1077 = vmatpush.bf16.msra.mxu0 0
  %1078 = vmatpush.bf16.msra.mxu0 0
  %1079 = vmatpush.bf16.msra.mxu0 0
  %1080 = vmatpush.bf16.msra.mxu0 0
  %1081 = vmatpush.bf16.msra.mxu0 0
  %1082 = vmatpush.bf16.msra.mxu0 0
  %1083 = vmatpush.bf16.msra.mxu0 0
  %1084 = vmatpush.bf16.msra.mxu0 %v1069
  %1085 = vmatmul.bf16.gmra.mxu0 %v1066
  %v1086 = vpop.f32.mrf.mxu0
  %v1087 = vadd.f32 0.0, %v1086
  %v1088 = vpop.f32.mrf.mxu0
  %1089 = vdwg.mxu0
  %1090 = vmatpush.bf16.msra.mxu0 0
  %1091 = vmatpush.bf16.msra.mxu0 0
  %1092 = vmatpush.bf16.msra.mxu0 0
  %1093 = vmatpush.bf16.msra.mxu0 0
  %1094 = vmatpush.bf16.msra.mxu0 0
  %1095 = vmatpush.bf16.msra.mxu0 0
  %1096 = vmatpush.bf16.msra.mxu0 0
  %1097 = vmatpush.bf16.msra.mxu0 %v1072
  %1098 = vmatmul.bf16.gmra.mxu0 %v1066
  %v1099 = vpop.f32.mrf.mxu0
  %v1100 = vadd.f32 0.0, %v1099
  %v1101 = vpop.f32.mrf.mxu0
  %1102 = vdwg.mxu0
  %1103 = vmatpush.bf16.msra.mxu0 0
  %1104 = vmatpush.bf16.msra.mxu0 0
  %1105 = vmatpush.bf16.msra.mxu0 0
  %1106 = vmatpush.bf16.msra.mxu0 0
  %1107 = vmatpush.bf16.msra.mxu0 0
  %1108 = vmatpush.bf16.msra.mxu0 0
  %1109 = vmatpush.bf16.msra.mxu0 0
  %1110 = vmatpush.bf16.msra.mxu0 %v1075
  %1111 = vmatmul.bf16.gmra.mxu0 %v1066
  %v1112 = vpop.f32.mrf.mxu0
  %v1113 = vadd.f32 0.0, %v1112
  %v1114 = vpop.f32.mrf.mxu0
  %1115 = vdwg.mxu0
  %v1116 = vadd.f32 %v1046, %v1087
  %v1117 = vadd.f32 %v1047, %v1100
  %v1118 = vadd.f32 %v1048, %v1113
  %v1119 = vld [vmem:[%s498] sm:$0xf]
  %1120 = vst [vmem:[#allocation1] ss:$4 sm:$0xff] %v647
  %v1121 = vld.sshfl [vmem:[#allocation1] sm:$0xff pattern:$0x73625140]
  %v1123 = vld.sshfl [vmem:[#allocation1 + $0x8] sm:$0xff pattern:$0x73625140]
  %v1125 = vld.sshfl [vmem:[#allocation1 + $0x10] sm:$0xff pattern:$0x73625140]
  %1127 = vrot.lane.b32.xlu0 %v1121, 91
  %v1128 = vpop.permute.xlu0 %1127
  %1129 = vrot.lane.b32.xlu0 %v1123, 91
  %v1130 = vpop.permute.xlu0 %1129
  %1131 = vrot.lane.b32.xlu0 %v1125, 91
  %v1132 = vpop.permute.xlu0 %1131
  %v1133 = vsel %vm513, %v1128, %v1130
  %v1134 = vsel %vm513, %v1130, %v1132
  %v1136 = vsel %vm33, %v1119, 0
  %v1139 = vsel %vm37, %v1133, 0
  %v1142 = vsel %vm37, %v1134, 0
  %v1145 = vsel %vm37, %v1132, 0
  %1147 = vmatpush.bf16.msra.mxu0 0
  %1148 = vmatpush.bf16.msra.mxu0 0
  %1149 = vmatpush.bf16.msra.mxu0 0
  %1150 = vmatpush.bf16.msra.mxu0 0
  %1151 = vmatpush.bf16.msra.mxu0 0
  %1152 = vmatpush.bf16.msra.mxu0 0
  %1153 = vmatpush.bf16.msra.mxu0 0
  %1154 = vmatpush.bf16.msra.mxu0 %v1139
  %1155 = vmatmul.bf16.gmra.mxu0 %v1136
  %v1156 = vpop.f32.mrf.mxu0
  %v1157 = vadd.f32 0.0, %v1156
  %v1158 = vpop.f32.mrf.mxu0
  %1159 = vdwg.mxu0
  %1160 = vmatpush.bf16.msra.mxu0 0
  %1161 = vmatpush.bf16.msra.mxu0 0
  %1162 = vmatpush.bf16.msra.mxu0 0
  %1163 = vmatpush.bf16.msra.mxu0 0
  %1164 = vmatpush.bf16.msra.mxu0 0
  %1165 = vmatpush.bf16.msra.mxu0 0
  %1166 = vmatpush.bf16.msra.mxu0 0
  %1167 = vmatpush.bf16.msra.mxu0 %v1142
  %1168 = vmatmul.bf16.gmra.mxu0 %v1136
  %v1169 = vpop.f32.mrf.mxu0
  %v1170 = vadd.f32 0.0, %v1169
  %v1171 = vpop.f32.mrf.mxu0
  %1172 = vdwg.mxu0
  %1173 = vmatpush.bf16.msra.mxu0 0
  %1174 = vmatpush.bf16.msra.mxu0 0
  %1175 = vmatpush.bf16.msra.mxu0 0
  %1176 = vmatpush.bf16.msra.mxu0 0
  %1177 = vmatpush.bf16.msra.mxu0 0
  %1178 = vmatpush.bf16.msra.mxu0 0
  %1179 = vmatpush.bf16.msra.mxu0 0
  %1180 = vmatpush.bf16.msra.mxu0 %v1145
  %1181 = vmatmul.bf16.gmra.mxu0 %v1136
  %v1182 = vpop.f32.mrf.mxu0
  %v1183 = vadd.f32 0.0, %v1182
  %v1184 = vpop.f32.mrf.mxu0
  %1185 = vdwg.mxu0
  %v1186 = vadd.f32 %v1116, %v1157
  %v1187 = vadd.f32 %v1117, %v1170
  %v1188 = vadd.f32 %v1118, %v1183
  %v1189 = vld [vmem:[%s570] sm:$0xf]
  %1190 = vst [vmem:[#allocation1] ss:$4 sm:$0xff] %v647
  %v1191 = vld.sshfl [vmem:[#allocation1] sm:$0xff pattern:$0x73625140]
  %v1193 = vld.sshfl [vmem:[#allocation1 + $0x8] sm:$0xff pattern:$0x73625140]
  %v1195 = vld.sshfl [vmem:[#allocation1 + $0x10] sm:$0xff pattern:$0x73625140]
  %1197 = vrot.lane.b32.xlu0 %v1191, 90
  %v1198 = vpop.permute.xlu0 %1197
  %1199 = vrot.lane.b32.xlu0 %v1193, 90
  %v1200 = vpop.permute.xlu0 %1199
  %1201 = vrot.lane.b32.xlu0 %v1195, 90
  %v1202 = vpop.permute.xlu0 %1201
  %v1203 = vsel %vm585, %v1198, %v1200
  %v1204 = vsel %vm585, %v1200, %v1202
  %v1206 = vsel %vm33, %v1189, 0
  %v1209 = vsel %vm37, %v1203, 0
  %v1212 = vsel %vm37, %v1204, 0
  %v1215 = vsel %vm37, %v1202, 0
  %1217 = vmatpush.bf16.msra.mxu0 0
  %1218 = vmatpush.bf16.msra.mxu0 0
  %1219 = vmatpush.bf16.msra.mxu0 0
  %1220 = vmatpush.bf16.msra.mxu0 0
  %1221 = vmatpush.bf16.msra.mxu0 0
  %1222 = vmatpush.bf16.msra.mxu0 0
  %1223 = vmatpush.bf16.msra.mxu0 0
  %1224 = vmatpush.bf16.msra.mxu0 %v1209
  %1225 = vmatmul.bf16.gmra.mxu0 %v1206
  %v1226 = vpop.f32.mrf.mxu0
  %v1227 = vadd.f32 0.0, %v1226
  %v1228 = vpop.f32.mrf.mxu0
  %1229 = vdwg.mxu0
  %1230 = vmatpush.bf16.msra.mxu0 0
  %1231 = vmatpush.bf16.msra.mxu0 0
  %1232 = vmatpush.bf16.msra.mxu0 0
  %1233 = vmatpush.bf16.msra.mxu0 0
  %1234 = vmatpush.bf16.msra.mxu0 0
  %1235 = vmatpush.bf16.msra.mxu0 0
  %1236 = vmatpush.bf16.msra.mxu0 0
  %1237 = vmatpush.bf16.msra.mxu0 %v1212
  %1238 = vmatmul.bf16.gmra.mxu0 %v1206
  %v1239 = vpop.f32.mrf.mxu0
  %v1240 = vadd.f32 0.0, %v1239
  %v1241 = vpop.f32.mrf.mxu0
  %1242 = vdwg.mxu0
  %1243 = vmatpush.bf16.msra.mxu0 0
  %1244 = vmatpush.bf16.msra.mxu0 0
  %1245 = vmatpush.bf16.msra.mxu0 0
  %1246 = vmatpush.bf16.msra.mxu0 0
  %1247 = vmatpush.bf16.msra.mxu0 0
  %1248 = vmatpush.bf16.msra.mxu0 0
  %1249 = vmatpush.bf16.msra.mxu0 0
  %1250 = vmatpush.bf16.msra.mxu0 %v1215
  %1251 = vmatmul.bf16.gmra.mxu0 %v1206
  %v1252 = vpop.f32.mrf.mxu0
  %v1253 = vadd.f32 0.0, %v1252
  %v1254 = vpop.f32.mrf.mxu0
  %1255 = vdwg.mxu0
  %v1256 = vadd.f32 %v1186, %v1227
  %v1257 = vadd.f32 %v1187, %v1240
  %v1258 = vadd.f32 %v1188, %v1253
  %s1259 = scalar_lea.vmem %s2, 24
  %1260 = vst [vmem:[%s1259] sm:$0xff] %v1256
  %1261 = vst [vmem:[%s1259 + $0x8] sm:$0xff] %v1257
  %1262 = vst.msk [vmem:[%s1259 + $0x10] sm:$0xff] %vm644, %v1258
  // Predicated region
  $region10: #{_lambda_.1} parent=0 // pred_check
    _
  $region11: #{_lambda_.1} parent=0 // pred_check_branch
    %1264 = sbr.rel (0) target = $region13
  $region12: #{_lambda_.1} parent=0 // pred_region
    _
  $region13: #{_lambda_.1} parent=0 // pred_fallthru
    _
  // Predicated region
  $region14: #{_lambda_.1} parent=0 // pred_check
    _
  $region15: #{_lambda_.1} parent=0 // pred_check_branch
    %1266 = sbr.rel (0) target = $region17
  $region16: #{_lambda_.1} parent=0 // pred_region
    _
  $region17: #{_lambda_.1} parent=0 // pred_fallthru
    _

</llo_original>
